<compile_context>
chip_gen: v5e
topology: v5e:2x2
jax: 0.10.0
libtpu: 0.0.40
codegen_flags: <defaults>
</compile_context>

<pallas_src>
import functools

import jax
import jax.numpy as jnp
from jax import lax
from jax.experimental import pallas as pl
from jax.experimental.pallas import tpu as pltpu


def _ce_loss_kernel(x_ref, lab_ref, loss_ref, *, ignore_lb):
    # x_ref   : (1, C, tile_hw)  logits, native dtype (f32 / bf16)
    # lab_ref : (1, 1, tile_hw)  int32 labels
    # loss_ref: (1, 1, tile_hw)  f32 per-pixel CE loss
    x = x_ref[0].astype(jnp.float32)          # (C, tile_hw): classes on sublanes
    lab = lab_ref[0]                          # (1, tile_hw)

    # stable logsumexp over the class (sublane) axis
    m = jnp.max(x, axis=0, keepdims=True)                         # (1, tile_hw)
    lse = m + jnp.log(jnp.sum(jnp.exp(x - m), axis=0, keepdims=True))

    # gather the logit at the label index via iota compare (no dynamic gather)
    cls_idx = lax.broadcasted_iota(jnp.int32, x.shape, 0)          # (C, tile_hw)
    picked = jnp.sum(jnp.where(cls_idx == lab, x, 0.0), axis=0, keepdims=True)

    ignore = lab == ignore_lb
    loss_ref[0] = jnp.where(ignore, 0.0, lse - picked)             # (1, tile_hw)


def _per_pixel_ce(logits_nchw, labels_nhw, *, ignore_lb, max_tile_hw):
    """Per-pixel CE loss (reduction='none'), returned flattened as (N*H*W,)."""
    N, C, H, W = logits_nchw.shape
    HW = H * W

    # Free views -- no transpose, no dtype change in HBM.
    x = logits_nchw.reshape(N, C, HW)
    lab = labels_nhw.reshape(N, 1, HW).astype(jnp.int32)

    # Pixel tile: full HW if it fits, otherwise a large multiple of 128 lanes.
    if HW <= max_tile_hw:
        tile_hw = HW
    else:
        tile_hw = max(128, (max_tile_hw // 128) * 128)
    num_t = pl.cdiv(HW, tile_hw)

    kernel = functools.partial(_ce_loss_kernel, ignore_lb=ignore_lb)

    losses = pl.pallas_call(
        kernel,
        out_shape=jax.ShapeDtypeStruct((N, 1, HW), jnp.float32),
        grid_spec=pltpu.PrefetchScalarGridSpec(
            num_scalar_prefetch=0,
            grid=(N, num_t),
            in_specs=[
                pl.BlockSpec((1, C, tile_hw), lambda n, t: (n, 0, t)),
                pl.BlockSpec((1, 1, tile_hw), lambda n, t: (n, 0, t)),
            ],
            out_specs=pl.BlockSpec((1, 1, tile_hw), lambda n, t: (n, 0, t)),
        ),
        compiler_params=pltpu.CompilerParams(
            dimension_semantics=("parallel", "parallel")),
    )(x, lab)

    return losses.reshape(N * HW)


def ohem_ce_loss(logits_nchw, labels_nhw, *, thresh_p=0.7, n_min=None,
                 ignore_lb=255, max_tile_hw=8192):
    """Matches OhemCELoss.forward(logits, labels)."""
    N, C, H, W = logits_nchw.shape
    P = N * H * W
    if n_min is None:
        n_min = P // 16
    thresh = -jnp.log(jnp.float32(thresh_p))

    losses = _per_pixel_ce(logits_nchw, labels_nhw,
                           ignore_lb=ignore_lb, max_tile_hw=max_tile_hw)

    # OHEM selection (plain JAX).
    #   sorted_desc[n_min] > thresh  <=>  count(loss > thresh) > n_min
    # TODO(synk): the descending sort / top-k fallback has no clean Pallas
    # equivalent; it and the final threshold reductions stay in JAX (which also
    # keeps both grid axes 'parallel' and the count exact in int32).
    gt = losses > thresh
    cnt_gt = jnp.sum(gt)                                    # exact int32 count
    sum_gt = jnp.sum(jnp.where(gt, losses, 0.0))
    mean_gt = sum_gt / jnp.maximum(cnt_gt.astype(jnp.float32), 1.0)

    topk_vals, _ = lax.top_k(losses, n_min)
    mean_topk = jnp.sum(topk_vals) / jnp.float32(n_min)

    return jnp.where(cnt_gt > n_min, mean_gt, mean_topk)


def _reference(logits_nchw, labels_nhw, *, thresh_p=0.7, n_min=None,
               ignore_lb=255):
    """Pure-JAX reference mirroring the PyTorch module."""
    N, C, H, W = logits_nchw.shape
    P = N * H * W
    if n_min is None:
        n_min = P // 16
    thresh = -jnp.log(jnp.float32(thresh_p))
    x = jnp.transpose(logits_nchw, (0, 2, 3, 1)).reshape(P, C).astype(jnp.float32)
    lab = labels_nhw.reshape(P).astype(jnp.int32)
    lse = jax.nn.logsumexp(x, axis=-1)
    safe_lab = jnp.where(lab == ignore_lb, 0, lab)
    picked = jnp.take_along_axis(x, safe_lab[:, None], axis=-1)[:, 0]
    loss = jnp.where(lab == ignore_lb, 0.0, lse - picked)
    loss_sorted = jnp.sort(loss)[::-1]
    keep_gt = loss_sorted > thresh
    mean_gt = jnp.sum(jnp.where(keep_gt, loss_sorted, 0.0)) / jnp.maximum(
        jnp.sum(keep_gt), 1)
    mean_topk = jnp.mean(loss_sorted[:n_min])
    return jnp.where(loss_sorted[n_min] > thresh, mean_gt, mean_topk)


def _make_inputs(key, N, C, H, W, ignore_lb=255, ignore_frac=0.1):
    k1, k2, k3 = jax.random.split(key, 3)
    logits = jax.random.normal(k1, (N, C, H, W), dtype=jnp.float32)
    labels = jax.random.randint(k2, (N, H, W), 0, C, dtype=jnp.int32)
    ignore_mask = jax.random.uniform(k3, (N, H, W)) < ignore_frac
    labels = jnp.where(ignore_mask, ignore_lb, labels)
    return logits, labels


if __name__ == "__main__":
    key = jax.random.PRNGKey(0)
    k_a, k_b = jax.random.split(key, 2)

    # Test 1: small NCHW batch, single pixel tile per image, batch axis on grid.
    N, C, H, W = 2, 4, 16, 16
    logits, labels = _make_inputs(k_a, N, C, H, W)
    n_min = (N * H * W) // 16

    out = ohem_ce_loss(logits, labels, thresh_p=0.7, n_min=n_min)
    out = jax.block_until_ready(out)
    ref = _reference(logits, labels, thresh_p=0.7, n_min=n_min)
    assert jnp.allclose(out, ref, rtol=1e-5, atol=1e-5), (out, ref)

    # Test 2: odd spatial size (H*W not a multiple of the tile) -> exercises the
    # pl.cdiv grid with a padded edge block, plus C not a multiple of 8.
    N2, C2, H2, W2 = 1, 5, 12, 27
    logits2, labels2 = _make_inputs(k_b, N2, C2, H2, W2)
    n_min2 = (N2 * H2 * W2) // 16

    out2 = ohem_ce_loss(logits2, labels2, thresh_p=0.7, n_min=n_min2,
                        max_tile_hw=256)
    out2 = jax.block_until_ready(out2)
    ref2 = _reference(logits2, labels2, thresh_p=0.7, n_min=n_min2)
    assert jnp.allclose(out2, ref2, rtol=1e-5, atol=1e-5), (out2, ref2)

    print("KERNEL_OK")
</pallas_src>

<mosaic_0001>
module attributes {stable_mosaic.version = 11 : i64} {
  func.func @_ce_loss_kernel(%arg0: i32, %arg1: i32, %arg2: memref<1x4x256xf32, #tpu.memory_space<vmem>>, %arg3: memref<1x1x256xi32, #tpu.memory_space<vmem>>, %arg4: memref<1x1x256xf32, #tpu.memory_space<vmem>>) attributes {dimension_semantics = [#tpu.dimension_semantics<parallel>, #tpu.dimension_semantics<parallel>], iteration_bounds = array<i64: 2, 1>, scalar_prefetch = 0 : i64, scratch_operands = 0 : i64, tpu.core_type = #tpu.core_type<tc>, window_params = [{transform_indices = @transform_0, window_bounds = array<i64: 1, 4, 256>}, {transform_indices = @transform_1, window_bounds = array<i64: 1, 1, 256>}, {transform_indices = @transform_2, window_bounds = array<i64: 1, 1, 256>}]} {
    %c0 = arith.constant 0 : index
    %c0_0 = arith.constant 0 : index
    %c0_1 = arith.constant 0 : index
    %0 = vector.load %arg2[%c0, %c0_0, %c0_1] : memref<1x4x256xf32, #tpu.memory_space<vmem>>, vector<1x4x256xf32>
    %1 = vector.shape_cast %0 : vector<1x4x256xf32> to vector<4x256xf32>
    %c0_2 = arith.constant 0 : index
    %c0_3 = arith.constant 0 : index
    %c0_4 = arith.constant 0 : index
    %2 = vector.load %arg3[%c0_2, %c0_3, %c0_4] : memref<1x1x256xi32, #tpu.memory_space<vmem>>, vector<1x1x256xi32>
    %3 = vector.shape_cast %2 : vector<1x1x256xi32> to vector<1x256xi32>
    %cst = arith.constant dense<0xFF800000> : vector<256xf32>
    %4 = vector.multi_reduction <maximumf>, %1, %cst [0] : vector<4x256xf32> to vector<256xf32>
    %5 = vector.shape_cast %4 : vector<256xf32> to vector<1x256xf32>
    %6 = vector.broadcast %5 : vector<1x256xf32> to vector<4x256xf32>
    %7 = arith.subf %1, %6 : vector<4x256xf32>
    %8 = math.exp %7 : vector<4x256xf32>
    %cst_5 = arith.constant dense<0.000000e+00> : vector<256xf32>
    %9 = vector.multi_reduction <add>, %8, %cst_5 [0] : vector<4x256xf32> to vector<256xf32>
    %10 = vector.shape_cast %9 : vector<256xf32> to vector<1x256xf32>
    %11 = math.log %10 : vector<1x256xf32>
    %12 = arith.addf %5, %11 : vector<1x256xf32>
    %13 = tpu.iota {dimensions = array<i32: 0>} : vector<4x256xi32>
    %14 = vector.broadcast %3 : vector<1x256xi32> to vector<4x256xi32>
    %15 = arith.cmpi eq, %13, %14 : vector<4x256xi32>
    %cst_6 = arith.constant 0.000000e+00 : f32
    %16 = vector.broadcast %cst_6 : f32 to vector<4x256xf32>
    %17 = arith.select %15, %1, %16 : vector<4x256xi1>, vector<4x256xf32>
    %cst_7 = arith.constant dense<0.000000e+00> : vector<256xf32>
    %18 = vector.multi_reduction <add>, %17, %cst_7 [0] : vector<4x256xf32> to vector<256xf32>
    %19 = vector.shape_cast %18 : vector<256xf32> to vector<1x256xf32>
    %c255_i32 = arith.constant 255 : i32
    %20 = vector.broadcast %c255_i32 : i32 to vector<1x256xi32>
    %21 = arith.cmpi eq, %3, %20 : vector<1x256xi32>
    %22 = arith.subf %12, %19 : vector<1x256xf32>
    %cst_8 = arith.constant 0.000000e+00 : f32
    %23 = vector.broadcast %cst_8 : f32 to vector<1x256xf32>
    %24 = arith.select %21, %23, %22 : vector<1x256xi1>, vector<1x256xf32>
    %c0_9 = arith.constant 0 : index
    %c0_10 = arith.constant 0 : index
    %c0_11 = arith.constant 0 : index
    %25 = vector.load %arg4[%c0_9, %c0_10, %c0_11] : memref<1x1x256xf32, #tpu.memory_space<vmem>>, vector<1x1x256xf32>
    %26 = vector.shape_cast %25 : vector<1x1x256xf32> to vector<1x256xf32>
    %27 = vector.shape_cast %24 : vector<1x256xf32> to vector<1x1x256xf32>
    tpu.vector_store %arg4[%c0_9, %c0_10, %c0_11], %27 {strides = array<i32>} : memref<1x1x256xf32, #tpu.memory_space<vmem>>, vector<1x1x256xf32>,
    return
  }
  func.func @transform_0(%arg0: i32, %arg1: i32) -> (i32, i32, i32) {
    %c0_i32 = arith.constant 0 : i32
    %c0_i32_0 = arith.constant 0 : i32
    return %arg0, %c0_i32, %arg1 : i32, i32, i32
  }
  func.func @transform_1(%arg0: i32, %arg1: i32) -> (i32, i32, i32) {
    %c0_i32 = arith.constant 0 : i32
    %c0_i32_0 = arith.constant 0 : i32
    return %arg0, %c0_i32, %arg1 : i32, i32, i32
  }
  func.func @transform_2(%arg0: i32, %arg1: i32) -> (i32, i32, i32) {
    %c0_i32 = arith.constant 0 : i32
    %c0_i32_0 = arith.constant 0 : i32
    return %arg0, %c0_i32, %arg1 : i32, i32, i32
  }
}

</mosaic_0001>

<llo_original>
// kernel: tpu_custom_call.1
$region0: #{tpu_custom_call.1}
  #allocation0 [shape = 'u32[]', space=smem, size = 0x4, offset = 0x4, fixed_abs, tag = 'smem constant byte address 0x4 - core index']
  #allocation1 [shape = 'u32[72,128]{1,0:T(1,128)}', space=vmem, size = 0x9000, scoped, tag = 'internal scratch']
  %s0 = inlined_call_operand.hbm [shape: f32[2,4,256], index: 0, kind: input, shape index: {}]
  %s1 = inlined_call_operand.hbm [shape: s32[2,1,256], index: 1, kind: input, shape index: {}]
  %s2 = inlined_call_operand.hbm [shape: f32[2,1,256], index: 2, kind: output, shape index: {}]
  %s3 = sld [smem:[#allocation0]]
  $region49: #{tpu_custom_call.1} parent=0
    _
  %s5 = ssub.s32 1, %s3
  %s6 = scalar_select 0, %s5, %s3
  $region1: #{tpu_custom_call.1} parent=0
    #allocation2 [shape = 'u8[8192]{0}', space=vmem, size = 0x2000, scoped, tag = 'input window, operand 0']
    #allocation3 [shape = 's32[2]{0}', space=sflag, size = 0x8, scoped, tag = 'scoped memory for tpu_custom_call.1']
    #allocation4 [shape = 's32[2]{0}', space=sflag, size = 0x8, scoped, tag = 'scoped memory for tpu_custom_call.1']
    #allocation5 [shape = 'u8[2048]{0}', space=vmem, size = 0x800, scoped, tag = 'input window, operand 1']
    #allocation6 [shape = 's32[2]{0}', space=sflag, size = 0x8, scoped, tag = 'scoped memory for tpu_custom_call.1']
    #allocation7 [shape = 'u8[2048]{0}', space=vmem, size = 0x800, scoped, tag = 'output window, operand 0']
    %7 = vsyncpa [#allocation3], 0
    %s8 = scalar_lea.sflag [#allocation3], 1
    %9 = vsyncpa %s8, 0
    %10 = vsyncpa [#allocation6], 0
    %s11 = scalar_lea.sflag [#allocation6], 1
    %12 = vsyncpa %s11, 0
    %13 = vsyncpa [#allocation4], 0
    %s14 = scalar_lea.sflag [#allocation4], 1
    %15 = vsyncpa %s14, 0
    loop: start=0, step=1, limit=4
    $region2: #{tpu_custom_call.1} parent=1 // loop_pre_header
      _
    $region3: #{tpu_custom_call.1} parent=1 // loop_header
      %s17 = sphi 0, %s21
      %p18 = scmp.ge.s32.totalorder %s17, 4
      %s24 = sphi 0, %s36
      %s25 = sphi 0, %s32
      %s26 = sphi 0, %s24
      %s27 = sphi 0, %s25
      %s28 = sphi 0, %s26
      %s29 = sphi 0, %s27
      %s41 = sphi 0, %s43
      %s44 = sphi 0, %s41
      %s45 = sphi 0, %s44
      %s61 = sphi 0, %s45
      %s69 = sphi 0, %s71
      %s72 = sphi 0, %s69
      %s73 = sphi 0, %s72
      %s89 = sphi 0, %s73
      %s97 = sphi 0, %s99
      %s100 = sphi 0, %s97
      %s101 = sphi 0, %s100
      %s117 = sphi 0, %s101
    $region4: #{tpu_custom_call.1} parent=1 // loop_header_branch
      %20 = sbr.rel (%p18) target = $region8
    $region5: #{tpu_custom_call.1} parent=1 // loop_body
      %s22 = ssub.s32 %s17, 1
      %s23 = ssub.s32 %s17, 2
      %s30 = sadd.s32 1, %s25
      %p31 = scmp.ge.s32.totalorder %s30, 1
      %s32 = scalar_select %p31, 0, %s30
      %s33 = sadd.s32 1, %s24
      %s34 = scalar_select %p31, %s33, %s24
      %p35 = scmp.ge.s32.totalorder %s34, 2
      %s36 = scalar_select %p35, 0, %s34
      %s37 = ssub.s32 %s24, %s36
      %s38 = ssub.s32 %s25, %s32
      %s39 = sor.u32 %s37, %s38
      %p40 = scmp.eq.s32.totalorder %s39, 0
      %s42 = sadd.s32 %s41, 1
      %s43 = scalar_select %p40, %s41, %s42
      %p46 = pneg %p40
      %p47 = scmp.eq.s32.totalorder %s17, 1
      %p48 = por %p46, %p47
      %p49 = scmp.ne.s32.totalorder %s41, %s44
      %p50 = scmp.eq.s32.totalorder %s17, 0
      %p51 = por %p49, %p50
      %p52 = scmp.ne.s32.totalorder %s41, %s44
      %p53 = scmp.eq.s32.totalorder %s22, 1
      %p54 = por %p52, %p53
      %p55 = scmp.ne.s32.totalorder %s44, %s45
      %p56 = scmp.eq.s32.totalorder %s22, 0
      %p57 = por %p55, %p56
      %p58 = scmp.ne.s32.totalorder %s44, %s45
      %p59 = scmp.eq.s32.totalorder %s23, 1
      %p60 = por %p58, %p59
      %p62 = scmp.ne.s32.totalorder %s45, %s61
      %p63 = scmp.eq.s32.totalorder %s23, 0
      %p64 = por %p62, %p63
      %s65 = ssub.s32 %s24, %s36
      %s66 = ssub.s32 %s25, %s32
      %s67 = sor.u32 %s65, %s66
      %p68 = scmp.eq.s32.totalorder %s67, 0
      %s70 = sadd.s32 %s69, 1
      %s71 = scalar_select %p68, %s69, %s70
      %p74 = pneg %p68
      %p75 = scmp.eq.s32.totalorder %s17, 1
      %p76 = por %p74, %p75
      %p77 = scmp.ne.s32.totalorder %s69, %s72
      %p78 = scmp.eq.s32.totalorder %s17, 0
      %p79 = por %p77, %p78
      %p80 = scmp.ne.s32.totalorder %s69, %s72
      %p81 = scmp.eq.s32.totalorder %s22, 1
      %p82 = por %p80, %p81
      %p83 = scmp.ne.s32.totalorder %s72, %s73
      %p84 = scmp.eq.s32.totalorder %s22, 0
      %p85 = por %p83, %p84
      %p86 = scmp.ne.s32.totalorder %s72, %s73
      %p87 = scmp.eq.s32.totalorder %s23, 1
      %p88 = por %p86, %p87
      %p90 = scmp.ne.s32.totalorder %s73, %s89
      %p91 = scmp.eq.s32.totalorder %s23, 0
      %p92 = por %p90, %p91
      %s93 = ssub.s32 %s24, %s36
      %s94 = ssub.s32 %s25, %s32
      %s95 = sor.u32 %s93, %s94
      %p96 = scmp.eq.s32.totalorder %s95, 0
      %s98 = sadd.s32 %s97, 1
      %s99 = scalar_select %p96, %s97, %s98
      %p102 = pneg %p96
      %p103 = scmp.eq.s32.totalorder %s17, 1
      %p104 = por %p102, %p103
      %p105 = scmp.ne.s32.totalorder %s97, %s100
      %p106 = scmp.eq.s32.totalorder %s17, 0
      %p107 = por %p105, %p106
      %p108 = scmp.ne.s32.totalorder %s97, %s100
      %p109 = scmp.eq.s32.totalorder %s22, 1
      %p110 = por %p108, %p109
      %p111 = scmp.ne.s32.totalorder %s100, %s101
      %p112 = scmp.eq.s32.totalorder %s22, 0
      %p113 = por %p111, %p112
      %p114 = scmp.ne.s32.totalorder %s100, %s101
      %p115 = scmp.eq.s32.totalorder %s23, 1
      %p116 = por %p114, %p115
      %p118 = scmp.ne.s32.totalorder %s101, %s117
      %p119 = scmp.eq.s32.totalorder %s23, 0
      %p120 = por %p118, %p119
      %p121 = scmp.le.s32.totalorder 1, %s17
      %p122 = scmp.lt.s32.totalorder %s17, 3
      %p123 = pnand %p121, %p122
      %p124 = pneg %p123
      // Predicated region
      $region9: #{tpu_custom_call.1} parent=5 // pred_check
        _
      $region10: #{tpu_custom_call.1} parent=5 // pred_check_branch
        %126 = sbr.rel (%p123) target = $region12
      $region11: #{tpu_custom_call.1} parent=5 // pred_region
        %s127 = ssub.s32 %s17, 1
      $region12: #{tpu_custom_call.1} parent=5 // pred_fallthru
        _
      %p128 = scmp.lt.s32.totalorder %s17, 2
      // Predicated region
      $region13: #{tpu_custom_call.1} parent=5 // pred_check
        %p129 = pneg %p128
      $region14: #{tpu_custom_call.1} parent=5 // pred_check_branch
        %131 = sbr.rel (%p129) target = $region16
      $region15: #{tpu_custom_call.1} parent=5 // pred_region
        // Predicated region
        $region17: #{tpu_custom_call.1} parent=15 // pred_check
          %p132 = pneg %p51
        $region18: #{tpu_custom_call.1} parent=15 // pred_check_branch
          %134 = sbr.rel (%p132) target = $region20
        $region19: #{tpu_custom_call.1} parent=15 // pred_region
          %s135 = sand.u32 %s41, 1
          %s136 = scalar_lea.sflag [#allocation3], %s135
          %s137 = sand.u32 %s41, 1
          %s138 = smul.addr %s137, 8
          %s139 = scalar_lea.vmem [#allocation2], %s138
          %s140 = smul.u32 2, %s25
          %142 = vsyncadd %s136, 0
          %s143 = smul.addr %s24, 2
          %s144 = sadd.s32 %s140, %s143
          %s145 = smul.addr %s144, 4
          %s146 = scalar_lea.hbm %s0, %s145
          %s148 = sshll.u32 %s146, 4
          %s149 = int_to_ptr.hbm [resolvable:$true] %s148
          %s150 = sshll.u32 %s139, 4
          %s151 = int_to_ptr.vmem [resolvable:$true] %s150
          %153 = dma.hbm_to_vmem [thread:$0]  %s149, 128, %s151, %s136
        $region20: #{tpu_custom_call.1} parent=15 // pred_fallthru
          _
        // Predicated region
        $region21: #{tpu_custom_call.1} parent=15 // pred_check
          %p154 = pneg %p79
        $region22: #{tpu_custom_call.1} parent=15 // pred_check_branch
          %156 = sbr.rel (%p154) target = $region24
        $region23: #{tpu_custom_call.1} parent=15 // pred_region
          %s157 = sand.u32 %s69, 1
          %s158 = scalar_lea.sflag [#allocation6], %s157
          %s159 = sand.u32 %s69, 1
          %s160 = smul.addr %s159, 2
          %s161 = scalar_lea.vmem [#allocation5], %s160
          %s162 = smul.u32 2, %s25
          %164 = vsyncadd %s158, 0
          %s165 = smul.addr %s24, 2
          %s166 = sadd.s32 %s162, %s165
          %s167 = scalar_lea.hbm %s1, %s166
          %s169 = sshll.u32 %s167, 4
          %s170 = int_to_ptr.hbm [resolvable:$true] %s169
          %s171 = sshll.u32 %s161, 4
          %s172 = int_to_ptr.vmem [resolvable:$true] %s171
          %174 = dma.hbm_to_vmem [thread:$0]  %s170, 32, %s172, %s158
        $region24: #{tpu_custom_call.1} parent=15 // pred_fallthru
          _
      $region16: #{tpu_custom_call.1} parent=5 // pred_fallthru
        _
      %p175 = scmp.le.s32.totalorder 1, %s17
      %p176 = scmp.lt.s32.totalorder %s17, 3
      %p177 = pnand %p175, %p176
      %p178 = pneg %p177
      // Predicated region
      $region25: #{tpu_custom_call.1} parent=5 // pred_check
        _
      $region26: #{tpu_custom_call.1} parent=5 // pred_check_branch
        %180 = sbr.rel (%p177) target = $region28
      $region27: #{tpu_custom_call.1} parent=5 // pred_region
        %s181 = ssub.s32 %s17, 1
        %s182 = sand.u32 %s44, 1
        %s183 = scalar_lea.sflag [#allocation3], %s182
        %s184 = sand.u32 %s44, 1
        %s185 = smul.addr %s184, 8
        %s186 = scalar_lea.vmem [#allocation2], %s185
        // Predicated region
        $region29: #{tpu_custom_call.1} parent=27 // pred_check
          %p187 = pneg %p57
        $region30: #{tpu_custom_call.1} parent=27 // pred_check_branch
          %189 = sbr.rel (%p187) target = $region32
        $region31: #{tpu_custom_call.1} parent=27 // pred_region
          %191 = dma.done %s183, 128
        $region32: #{tpu_custom_call.1} parent=27 // pred_fallthru
          _
        %s192 = sand.u32 %s72, 1
        %s193 = scalar_lea.sflag [#allocation6], %s192
        %s194 = sand.u32 %s72, 1
        %s195 = smul.addr %s194, 2
        %s196 = scalar_lea.vmem [#allocation5], %s195
        // Predicated region
        $region33: #{tpu_custom_call.1} parent=27 // pred_check
          %p197 = pneg %p85
        $region34: #{tpu_custom_call.1} parent=27 // pred_check_branch
          %199 = sbr.rel (%p197) target = $region36
        $region35: #{tpu_custom_call.1} parent=27 // pred_region
          %201 = dma.done %s193, 32
        $region36: #{tpu_custom_call.1} parent=27 // pred_fallthru
          _
        %s202 = sand.u32 %s44, 1
        %s203 = scalar_lea.sflag [#allocation3], %s202
        %s204 = sand.u32 %s44, 1
        %s205 = smul.addr %s204, 8
        %s206 = scalar_lea.vmem [#allocation2], %s205
        %p207 = pneg %p57
        %p208 = pneg %p54
        %s209 = sand.u32 %s72, 1
        %s210 = scalar_lea.sflag [#allocation6], %s209
        %s211 = sand.u32 %s72, 1
        %s212 = smul.addr %s211, 2
        %s213 = scalar_lea.vmem [#allocation5], %s212
        %p214 = pneg %p85
        %p215 = pneg %p82
        %p216 = pneg %p113
        %p217 = pneg %p110
        %s218 = sand.u32 %s100, 1
        %s219 = scalar_lea.sflag [#allocation4], %s218
        %s220 = sand.u32 %s100, 1
        %s221 = smul.addr %s220, 2
        %s222 = scalar_lea.vmem [#allocation7], %s221
        %s223 = smul.u32 2, %s27
        %s224 = smul.u32 2, %s27
        %s225 = smul.u32 2, %s27
        %v226 = vld [vmem:[%s186] sm:$0xff]
        %v227 = vld [vmem:[%s196] sm:$0x3]
        %229 = vst [vmem:[#allocation1] ss:$2 sm:$0xff] %v226
        %v230 = vld.sshfl [vmem:[#allocation1] sm:$0xff pattern:$0x75316420]
        %v231 = vld.sshfl [vmem:[#allocation1 + $0x8] sm:$0xff pattern:$0x75316420]
        %vm234 = vcmask 1043456
        %v235 = vsel %vm234, %v230, -inf
        %v236 = vrot.slane %v235, 4
        %v237 = vmax.f32 %v235, %v236
        %v238 = vrot.slane %v237, 2
        %v239 = vmax.f32 %v237, %v238
        %v240 = vrot.slane %v239, 1
        %v241 = vmax.f32 %v239, %v240
        %v242 = vsel %vm234, %v231, -inf
        %v243 = vrot.slane %v242, 4
        %v244 = vmax.f32 %v242, %v243
        %v245 = vrot.slane %v244, 2
        %v246 = vmax.f32 %v244, %v245
        %v247 = vrot.slane %v246, 1
        %v248 = vmax.f32 %v246, %v247
        %v251 = vrot.slane %v248, 4
        %v252 = vsel %vm234, %v241, %v251
        %v254 = vsub.f32 %v226, %v252
        %v255 = vmul.f32 %v254, 1.442695
        %v256 = vpow.pop %v255
        %258 = vst [vmem:[#allocation1] ss:$2 sm:$0xff] %v256
        %v259 = vld.sshfl [vmem:[#allocation1] sm:$0xff pattern:$0x75316420]
        %v260 = vld.sshfl [vmem:[#allocation1 + $0x8] sm:$0xff pattern:$0x75316420]
        %v263 = vsel %vm234, %v259, 0.0
        %v264 = vrot.slane %v263, 4
        %v265 = vadd.f32 %v263, %v264
        %v266 = vrot.slane %v265, 2
        %v267 = vadd.f32 %v265, %v266
        %v268 = vrot.slane %v267, 1
        %v269 = vadd.f32 %v267, %v268
        %v270 = vsel %vm234, %v260, 0.0
        %v271 = vrot.slane %v270, 4
        %v272 = vadd.f32 %v270, %v271
        %v273 = vrot.slane %v272, 2
        %v274 = vadd.f32 %v272, %v273
        %v275 = vrot.slane %v274, 1
        %v276 = vadd.f32 %v274, %v275
        %v277 = vlog2.pop %v269
        %v278 = vmul.f32 %v277, 0.6931472
        %v279 = vlog2.pop %v276
        %v280 = vmul.f32 %v279, 0.6931472
        %v281 = vadd.f32 %v241, %v278
        %v282 = vadd.f32 %v248, %v280
        %v283 = vlaneseq
        %v284 = vshrl.u32 %v283, 7
        %v285 = vperm.slane %v227, 0
        %v286 = vperm.slane %v227, 1
        %vm287 = vcmp.eq.s32.totalorder %v284, %v285
        %vm288 = vcmp.eq.s32.totalorder %v284, %v286
        %289 = vst [vmem:[#allocation1] ss:$2 sm:$0xff] %v226
        %v290 = vld.sshfl [vmem:[#allocation1] sm:$0xff pattern:$0x75316420]
        %v291 = vld.sshfl [vmem:[#allocation1 + $0x8] sm:$0xff pattern:$0x75316420]
        %v294 = vsel %vm287, %v290, 0.0
        %v295 = vsel %vm288, %v291, 0.0
        %v296 = vsel %vm234, %v294, 0.0
        %v297 = vrot.slane %v296, 4
        %v298 = vadd.f32 %v296, %v297
        %v299 = vrot.slane %v298, 2
        %v300 = vadd.f32 %v298, %v299
        %v301 = vrot.slane %v300, 1
        %v302 = vadd.f32 %v300, %v301
        %v303 = vsel %vm234, %v295, 0.0
        %v304 = vrot.slane %v303, 4
        %v305 = vadd.f32 %v303, %v304
        %v306 = vrot.slane %v305, 2
        %v307 = vadd.f32 %v305, %v306
        %v308 = vrot.slane %v307, 1
        %v309 = vadd.f32 %v307, %v308
        %vm310 = vcmp.eq.s32.totalorder %v227, 255
        %v311 = vsub.f32 %v281, %v302
        %v312 = vsub.f32 %v282, %v309
        %v315 = vrot.slane %v312, 7
        %vm316 = vcmask 1040384
        %v317 = vsel %vm316, %v311, %v315
        %v319 = vsel %vm310, 0.0, %v317
        %v320 = vlaneseq
        %vm321 = vcmp.ge.s32.totalorder %v320, 0
        %vm322 = vcmp.lt.s32.totalorder %v320, 256
        %vm323 = vmand %vm321, %vm322
        %324 = vst.msk [vmem:[%s222] sm:$0x3] %vm323, %v319
        %s325 = sand.u32 %s100, 1
        %s326 = scalar_lea.sflag [#allocation4], %s325
        %s327 = sand.u32 %s100, 1
        %s328 = smul.addr %s327, 2
        %s329 = scalar_lea.vmem [#allocation7], %s328
        // Predicated region
        $region37: #{tpu_custom_call.1} parent=27 // pred_check
          %p330 = pneg %p110
        $region38: #{tpu_custom_call.1} parent=27 // pred_check_branch
          %332 = sbr.rel (%p330) target = $region40
        $region39: #{tpu_custom_call.1} parent=27 // pred_region
          %s333 = smul.u32 2, %s27
          %335 = vsyncadd %s326, 0
          %s336 = smul.addr %s26, 2
          %s337 = sadd.s32 %s333, %s336
          %s338 = scalar_lea.hbm %s2, %s337
          %s340 = sshll.u32 %s329, 4
          %s341 = int_to_ptr.vmem [resolvable:$true] %s340
          %s342 = sshll.u32 %s338, 4
          %s343 = int_to_ptr.hbm [resolvable:$true] %s342
          %345 = dma.vmem_to_hbm [thread:$0]  %s341, 32, %s343, %s326
        $region40: #{tpu_custom_call.1} parent=27 // pred_fallthru
          _
      $region28: #{tpu_custom_call.1} parent=5 // pred_fallthru
        _
      %p346 = scmp.le.s32.totalorder 2, %s17
      // Predicated region
      $region41: #{tpu_custom_call.1} parent=5 // pred_check
        %p347 = pneg %p346
      $region42: #{tpu_custom_call.1} parent=5 // pred_check_branch
        %349 = sbr.rel (%p347) target = $region44
      $region43: #{tpu_custom_call.1} parent=5 // pred_region
        %s350 = ssub.s32 %s17, 2
        // Predicated region
        $region45: #{tpu_custom_call.1} parent=43 // pred_check
          %p351 = pneg %p116
        $region46: #{tpu_custom_call.1} parent=43 // pred_check_branch
          %353 = sbr.rel (%p351) target = $region48
        $region47: #{tpu_custom_call.1} parent=43 // pred_region
          %s354 = sand.u32 %s101, 1
          %s355 = scalar_lea.sflag [#allocation4], %s354
          %s356 = sand.u32 %s101, 1
          %s357 = smul.addr %s356, 2
          %s358 = scalar_lea.vmem [#allocation7], %s357
          %360 = dma.done %s355, 32
        $region48: #{tpu_custom_call.1} parent=43 // pred_fallthru
          _
      $region44: #{tpu_custom_call.1} parent=5 // pred_fallthru
        _
    $region6: #{tpu_custom_call.1} parent=1 // loop_footer
      %s21 = sadd.s32 1, %s17
    $region7: #{tpu_custom_call.1} parent=1 // loop_footer_branch
      %16 = sbr.rel target = $region3
    $region8: #{tpu_custom_call.1} parent=1 // loop_exit
      _
    %361 = vsyncpa [#allocation3], 1
    %s362 = scalar_lea.sflag [#allocation3], 1
    %363 = vsyncpa %s362, 1
    %364 = vsyncpa [#allocation6], 1
    %s365 = scalar_lea.sflag [#allocation6], 1
    %366 = vsyncpa %s365, 1
    %367 = vsyncpa [#allocation4], 1
    %s368 = scalar_lea.sflag [#allocation4], 1
    %369 = vsyncpa %s368, 1

</llo_original>
